<compile_context>
chip_gen: v7x
topology: tpu7x:2x2x1
jax: 0.10.0
libtpu: 0.0.40
codegen_flags: <defaults>
</compile_context>

<pallas_src>
import jax
import jax.numpy as jnp
from jax.experimental import pallas as pl
from jax.experimental.pallas import tpu as pltpu


def _round_up(x, m):
    return (x + m - 1) // m * m


# ----------------------------- Pallas kernel ------------------------------ #
def _linear_head_kernel(x_ref, wnet_ref, bnet_ref, wfc_ref, bfc_ref,
                        out_ref, feat_acc):
    # Grid: (batch tiles i, K tiles k). K is the reduction axis (innermost,
    # "arbitrary"); feat_acc is the resident f32 accumulator for this batch tile.
    #   x_ref:    (TB, TK)        bf16   flattened input tile
    #   wnet_ref: (TK, dim_hid)   bf16   frozen backbone weight tile
    #   bnet_ref: (1, dim_hid)    f32    frozen backbone bias
    #   wfc_ref:  (dim_hid, Npad) f32    fc weight (transposed, zero-padded cols)
    #   bfc_ref:  (1, Npad)       f32    fc bias (zero-padded)
    #   out_ref:  (TB, Npad)      f32    lane-dense output tile
    k = pl.program_id(1)

    @pl.when(k == 0)
    def _init():
        feat_acc[...] = jnp.zeros_like(feat_acc)

    # Backbone contraction: bf16 operands, f32 accumulate on the MXU.
    feat_acc[...] += jnp.dot(x_ref[...], wnet_ref[...],
                             preferred_element_type=jnp.float32)

    @pl.when(k == pl.num_programs(1) - 1)
    def _finalize():
        # Epilogue only on the last K step: bias + ReLU in f32 (no per-K-step
        # re-broadcast of biases), then the tiny fc matmul + bias, one store.
        feat = jnp.maximum(feat_acc[...] + bnet_ref[...], 0.0)
        out = jnp.dot(feat, wfc_ref[...], preferred_element_type=jnp.float32)
        out_ref[...] = (out + bfc_ref[...]).astype(out_ref.dtype)


# ------------------------------- wrapper ----------------------------------- #
def linear_head_forward(x, w_net, b_net, fc_w_t, fc_b, *,
                        batch_tile=128, k_tile=512):
    """Fused forward: relu(flatten(x) @ w_net + b_net) @ fc_w_t + fc_b."""
    B = x.shape[0]
    flat = x.reshape(B, -1)
    K = flat.shape[1]
    dim_hidden = w_net.shape[1]
    dim_out = fc_w_t.shape[1]

    # ---- tiling / padding (all pads are zeros, so results are unaffected) ----
    tb = min(batch_tile, _round_up(B, 8))       # batch tile: multiple of 8 sublanes
    b_pad = _round_up(B, tb)
    tk = min(k_tile, _round_up(K, 128))         # K tile: multiple of 128 lanes
    k_pad = _round_up(K, tk)
    n_pad = _round_up(dim_out, 128)             # lane-dense output width

    # bf16 operands for the big contraction (accumulated in f32 inside the kernel).
    flat_p = jnp.pad(flat.astype(jnp.bfloat16),
                     ((0, b_pad - B), (0, k_pad - K)))
    w_net_p = jnp.pad(w_net.astype(jnp.bfloat16), ((0, k_pad - K), (0, 0)))
    b_net_2d = b_net.reshape(1, dim_hidden).astype(jnp.float32)
    # fc stays f32 (tiny); zero-pad the extra output columns / bias lanes.
    w_fc_p = jnp.pad(fc_w_t.astype(jnp.float32), ((0, 0), (0, n_pad - dim_out)))
    b_fc_p = jnp.pad(fc_b.reshape(1, dim_out).astype(jnp.float32),
                     ((0, 0), (0, n_pad - dim_out)))

    grid = (b_pad // tb, k_pad // tk)

    out_padded = pl.pallas_call(
        _linear_head_kernel,
        out_shape=jax.ShapeDtypeStruct((b_pad, n_pad), jnp.float32),
        grid=grid,
        in_specs=[
            pl.BlockSpec((tb, tk), lambda i, k: (i, k)),             # flat x
            pl.BlockSpec((tk, dim_hidden), lambda i, k: (k, 0)),     # w_net
            pl.BlockSpec((1, dim_hidden), lambda i, k: (0, 0)),      # b_net
            pl.BlockSpec((dim_hidden, n_pad), lambda i, k: (0, 0)),  # fc W^T (padded)
            pl.BlockSpec((1, n_pad), lambda i, k: (0, 0)),           # fc b (padded)
        ],
        out_specs=pl.BlockSpec((tb, n_pad), lambda i, k: (i, 0)),
        scratch_shapes=[pltpu.VMEM((tb, dim_hidden), jnp.float32)],
        compiler_params=pltpu.CompilerParams(
            dimension_semantics=("parallel", "arbitrary"),
            vmem_limit_bytes=32 * 1024 * 1024),
    )(flat_p, w_net_p, b_net_2d, w_fc_p, b_fc_p)

    return out_padded[:B, :dim_out]


# ------------------------------ module port -------------------------------- #
class LinearHeadPallas:
    """JAX/Pallas port of LinearHead: frozen backbone + trainable nn.Linear."""

    def __init__(self, key, in_features_flat, dim_in=32, dim_out=16):
        k_net_w, k_net_b, k_fc_w = jax.random.split(key, 3)
        # Frozen backbone params (synthetic stand-in; deterministic init).
        self.w_net = jax.random.normal(
            k_net_w, (in_features_flat, dim_in), jnp.float32) * 0.05
        self.b_net = jax.random.normal(k_net_b, (dim_in,), jnp.float32) * 0.05
        # fc: torch weight shape (dim_out, dim_in) ~ N(0, 0.01); bias zero.
        fc_w_torch = jax.random.normal(
            k_fc_w, (dim_out, dim_in), jnp.float32) * 0.01
        self.fc_w_t = fc_w_torch.T                      # (dim_in, dim_out)
        self.fc_b = jnp.zeros((dim_out,), jnp.float32)

    def __call__(self, x):
        # Frozen backbone params: no gradient flows into them (torch.no_grad()).
        w_net = jax.lax.stop_gradient(self.w_net)
        b_net = jax.lax.stop_gradient(self.b_net)
        return linear_head_forward(x, w_net, b_net, self.fc_w_t, self.fc_b)


# ---------------------------------- main ------------------------------------ #
if __name__ == "__main__":
    key = jax.random.PRNGKey(0)
    k_x, k_params = jax.random.split(key)

    B, C, H, W = 2, 4, 16, 16          # NCHW input, small shapes
    dim_in, dim_out = 32, 16

    x = jax.random.normal(k_x, (B, C, H, W), jnp.float32)

    model = LinearHeadPallas(k_params, in_features_flat=C * H * W,
                             dim_in=dim_in, dim_out=dim_out)

    out = jax.block_until_ready(model(x))
    assert out.shape == (B, dim_out)

    # Reference (plain JAX), modelling the kernel's bf16-operand / f32-accumulate
    # backbone contraction so the comparison is apples-to-apples.
    flat = x.reshape(B, -1)
    flat_bf = flat.astype(jnp.bfloat16).astype(jnp.float32)
    w_net_bf = model.w_net.astype(jnp.bfloat16).astype(jnp.float32)
    feat_ref = jax.nn.relu(flat_bf @ w_net_bf + model.b_net)
    ref = feat_ref @ model.fc_w_t + model.fc_b

    max_err = float(jnp.max(jnp.abs(out - ref)))
    assert jnp.allclose(out, ref, atol=5e-3, rtol=5e-3), max_err

    print("KERNEL_OK")
</pallas_src>

<mosaic_0001>
module attributes {stable_mosaic.version = 11 : i64} {
  func.func @_linear_head_kernel(%arg0: i32, %arg1: i32, %arg2: memref<8x512xbf16, #tpu.memory_space<vmem>>, %arg3: memref<512x32xbf16, #tpu.memory_space<vmem>>, %arg4: memref<1x32xf32, #tpu.memory_space<vmem>>, %arg5: memref<32x128xf32, #tpu.memory_space<vmem>>, %arg6: memref<1x128xf32, #tpu.memory_space<vmem>>, %arg7: memref<8x128xf32, #tpu.memory_space<vmem>>, %arg8: memref<8x32xf32, #tpu.memory_space<vmem>>) attributes {dimension_semantics = [#tpu.dimension_semantics<parallel>, #tpu.dimension_semantics<arbitrary>], iteration_bounds = array<i64: 1, 2>, scalar_prefetch = 0 : i64, scratch_operands = 1 : i64, tpu.core_type = #tpu.core_type<tc>, window_params = [{transform_indices = @transform_0, window_bounds = array<i64: 8, 512>}, {transform_indices = @transform_1, window_bounds = array<i64: 512, 32>}, {pipeline_mode = #tpu.pipeline_mode<synchronous>, transform_indices = @transform_2, window_bounds = array<i64: 1, 32>}, {pipeline_mode = #tpu.pipeline_mode<synchronous>, transform_indices = @transform_3, window_bounds = array<i64: 32, 128>}, {pipeline_mode = #tpu.pipeline_mode<synchronous>, transform_indices = @transform_4, window_bounds = array<i64: 1, 128>}, {transform_indices = @transform_5, window_bounds = array<i64: 8, 128>}]} {
    %c0_i32 = arith.constant 0 : i32
    %0 = arith.cmpi eq, %arg1, %c0_i32 : i32
    %1 = arith.extui %0 : i1 to i32
    %c0_i32_0 = arith.constant 0 : i32
    %2 = arith.cmpi ne, %1, %c0_i32_0 : i32
    scf.if %2 {
      %cst_9 = arith.constant 0.000000e+00 : f32
      %12 = vector.broadcast %cst_9 : f32 to vector<8x32xf32>
      %c0_10 = arith.constant 0 : index
      %c0_11 = arith.constant 0 : index
      %13 = vector.load %arg8[%c0_10, %c0_11] : memref<8x32xf32, #tpu.memory_space<vmem>>, vector<8x32xf32>
      tpu.vector_store %arg8[%c0_10, %c0_11], %12 {strides = array<i32>} : memref<8x32xf32, #tpu.memory_space<vmem>>, vector<8x32xf32>,
    } else {
    }
    %c0 = arith.constant 0 : index
    %c0_1 = arith.constant 0 : index
    %3 = vector.load %arg8[%c0, %c0_1] : memref<8x32xf32, #tpu.memory_space<vmem>>, vector<8x32xf32>
    %c0_2 = arith.constant 0 : index
    %c0_3 = arith.constant 0 : index
    %4 = vector.load %arg2[%c0_2, %c0_3] : memref<8x512xbf16, #tpu.memory_space<vmem>>, vector<8x512xbf16>
    %c0_4 = arith.constant 0 : index
    %c0_5 = arith.constant 0 : index
    %5 = vector.load %arg3[%c0_4, %c0_5] : memref<512x32xbf16, #tpu.memory_space<vmem>>, vector<512x32xbf16>
    %cst = arith.constant dense<0.000000e+00> : vector<8x32xf32>
    %6 = tpu.matmul %4, %5, %cst {dimension_numbers = #tpu.dot_dimension_numbers<[1], [0], [0], [1], [0, 0, 1, 1], [], []>} : vector<8x512xbf16>, vector<512x32xbf16>, vector<8x32xf32> -> vector<8x32xf32>
    %7 = arith.addf %3, %6 : vector<8x32xf32>
    %c0_6 = arith.constant 0 : index
    %c0_7 = arith.constant 0 : index
    %8 = vector.load %arg8[%c0_6, %c0_7] : memref<8x32xf32, #tpu.memory_space<vmem>>, vector<8x32xf32>
    tpu.vector_store %arg8[%c0_6, %c0_7], %7 {strides = array<i32>} : memref<8x32xf32, #tpu.memory_space<vmem>>, vector<8x32xf32>,
    %c1_i32 = arith.constant 1 : i32
    %9 = arith.cmpi eq, %arg1, %c1_i32 : i32
    %10 = arith.extui %9 : i1 to i32
    %c0_i32_8 = arith.constant 0 : i32
    %11 = arith.cmpi ne, %10, %c0_i32_8 : i32
    scf.if %11 {
      %c0_9 = arith.constant 0 : index
      %c0_10 = arith.constant 0 : index
      %12 = vector.load %arg8[%c0_9, %c0_10] : memref<8x32xf32, #tpu.memory_space<vmem>>, vector<8x32xf32>
      %c0_11 = arith.constant 0 : index
      %c0_12 = arith.constant 0 : index
      %13 = vector.load %arg4[%c0_11, %c0_12] : memref<1x32xf32, #tpu.memory_space<vmem>>, vector<1x32xf32>
      %14 = vector.broadcast %13 : vector<1x32xf32> to vector<8x32xf32>
      %15 = arith.addf %12, %14 : vector<8x32xf32>
      %cst_13 = arith.constant 0.000000e+00 : f32
      %16 = vector.broadcast %cst_13 : f32 to vector<8x32xf32>
      %17 = arith.maximumf %15, %16 : vector<8x32xf32>
      %c0_14 = arith.constant 0 : index
      %c0_15 = arith.constant 0 : index
      %18 = vector.load %arg5[%c0_14, %c0_15] : memref<32x128xf32, #tpu.memory_space<vmem>>, vector<32x128xf32>
      %cst_16 = arith.constant dense<0.000000e+00> : vector<8x128xf32>
      %19 = tpu.matmul %17, %18, %cst_16 {dimension_numbers = #tpu.dot_dimension_numbers<[1], [0], [0], [1], [0, 0, 1, 1], [], []>} : vector<8x32xf32>, vector<32x128xf32>, vector<8x128xf32> -> vector<8x128xf32>
      %c0_17 = arith.constant 0 : index
      %c0_18 = arith.constant 0 : index
      %20 = vector.load %arg6[%c0_17, %c0_18] : memref<1x128xf32, #tpu.memory_space<vmem>>, vector<1x128xf32>
      %21 = vector.broadcast %20 : vector<1x128xf32> to vector<8x128xf32>
      %22 = arith.addf %19, %21 : vector<8x128xf32>
      %c0_19 = arith.constant 0 : index
      %c0_20 = arith.constant 0 : index
      %23 = vector.load %arg7[%c0_19, %c0_20] : memref<8x128xf32, #tpu.memory_space<vmem>>, vector<8x128xf32>
      tpu.vector_store %arg7[%c0_19, %c0_20], %22 {strides = array<i32>} : memref<8x128xf32, #tpu.memory_space<vmem>>, vector<8x128xf32>,
    } else {
    }
    return
  }
  func.func @transform_0(%arg0: i32, %arg1: i32) -> (i32, i32) {
    %c0_i32 = arith.constant 0 : i32
    return %arg0, %arg1 : i32, i32
  }
  func.func @transform_1(%arg0: i32, %arg1: i32) -> (i32, i32) {
    %c0_i32 = arith.constant 0 : i32
    %c0_i32_0 = arith.constant 0 : i32
    return %arg1, %c0_i32 : i32, i32
  }
  func.func @transform_2(%arg0: i32, %arg1: i32) -> (i32, i32) {
    %c0_i32 = arith.constant 0 : i32
    %c0_i32_0 = arith.constant 0 : i32
    %c0_i32_1 = arith.constant 0 : i32
    return %c0_i32, %c0_i32_0 : i32, i32
  }
  func.func @transform_3(%arg0: i32, %arg1: i32) -> (i32, i32) {
    %c0_i32 = arith.constant 0 : i32
    %c0_i32_0 = arith.constant 0 : i32
    %c0_i32_1 = arith.constant 0 : i32
    return %c0_i32, %c0_i32_0 : i32, i32
  }
  func.func @transform_4(%arg0: i32, %arg1: i32) -> (i32, i32) {
    %c0_i32 = arith.constant 0 : i32
    %c0_i32_0 = arith.constant 0 : i32
    %c0_i32_1 = arith.constant 0 : i32
    return %c0_i32, %c0_i32_0 : i32, i32
  }
  func.func @transform_5(%arg0: i32, %arg1: i32) -> (i32, i32) {
    %c0_i32 = arith.constant 0 : i32
    %c0_i32_0 = arith.constant 0 : i32
    return %arg0, %c0_i32 : i32, i32
  }
}

</mosaic_0001>

<llo_original>
// kernel: tpu_custom_call.1
$region0: #{tpu_custom_call.1}
  #allocation0 [shape = 'u32[]', space=smem, size = 0x4, offset = 0x4, fixed_abs, tag = 'smem constant byte address 0x4 - core index']
  #allocation1 [shape = 'u32[144,128]{1,0:T(1,128)}', space=vmem, size = 0x12000, scoped, tag = 'internal scratch']
  #allocation2 [shape = 'f32[8,32]{1,0:T(8,128)}', space=vmem, size = 0x1000, scoped, tag = 'scratch operand']
  %s0 = inlined_call_operand.vmem [shape: bf16[8,1024], index: 0, kind: input, shape index: {}]
  %s1 = inlined_call_operand.vmem [shape: bf16[1024,32], index: 1, kind: input, shape index: {}]
  %s2 = inlined_call_operand.vmem [shape: f32[1,32], index: 2, kind: input, shape index: {}]
  %s3 = inlined_call_operand.vmem [shape: f32[32,128], index: 3, kind: input, shape index: {}]
  %s4 = inlined_call_operand.vmem [shape: f32[1,128], index: 4, kind: input, shape index: {}]
  %s5 = inlined_call_operand.hbm [shape: f32[8,128], index: 5, kind: output, shape index: {}]
  %s6 = sld [smem:[#allocation0]]
  $region61: #{tpu_custom_call.1} parent=0
    _
  %s8 = ssub.s32 1, %s6
  %s9 = scalar_select 0, %s8, %s6
  $region1: #{tpu_custom_call.1} parent=0
    #allocation3 [shape = 'u8[4096]{0}', space=vmem, size = 0x1000, scoped, tag = 'output window, operand 0, single buffered']
    #allocation4 [shape = 's32[2]{0}', space=sflag, size = 0x8, scoped, tag = 'scoped memory for tpu_custom_call.1']
    %10 = vsyncpa [#allocation4], 0
    loop: start=0, step=1, limit=4
    $region2: #{tpu_custom_call.1} parent=1 // loop_pre_header
      _
    $region3: #{tpu_custom_call.1} parent=1 // loop_header
      %s12 = sphi 0, %s16
      %p13 = scmp.ge.s32.totalorder %s12, 4
      %s19 = sphi 0, %s31
      %s20 = sphi 0, %s27
      %s21 = sphi 0, %s19
      %s22 = sphi 0, %s20
      %s23 = sphi 0, %s21
      %s24 = sphi 0, %s22
      %s36 = sphi 0, %s38
      %s39 = sphi 0, %s36
      %s40 = sphi 0, %s39
      %s56 = sphi 0, %s40
      %s62 = sphi 0, %s64
      %s65 = sphi 0, %s62
      %s66 = sphi 0, %s65
      %s82 = sphi 0, %s66
      %s86 = sphi 0, %s86
      %s88 = sphi 0, %s86
      %s89 = sphi 0, %s88
      %s103 = sphi 0, %s89
      %s107 = sphi 0, %s107
      %s109 = sphi 0, %s107
      %s110 = sphi 0, %s109
      %s124 = sphi 0, %s110
      %s128 = sphi 0, %s128
      %s130 = sphi 0, %s128
      %s131 = sphi 0, %s130
      %s145 = sphi 0, %s131
      %s151 = sphi 0, %s153
      %s154 = sphi 0, %s151
      %s155 = sphi 0, %s154
      %s171 = sphi 0, %s155
    $region4: #{tpu_custom_call.1} parent=1 // loop_header_branch
      %15 = sbr.rel (%p13) target = $region8
    $region5: #{tpu_custom_call.1} parent=1 // loop_body
      %s17 = ssub.s32 %s12, 1
      %s18 = ssub.s32 %s12, 2
      %s25 = sadd.s32 1, %s20
      %p26 = scmp.ge.s32.totalorder %s25, 2
      %s27 = scalar_select %p26, 0, %s25
      %s28 = sadd.s32 1, %s19
      %s29 = scalar_select %p26, %s28, %s19
      %p30 = scmp.ge.s32.totalorder %s29, 1
      %s31 = scalar_select %p30, 0, %s29
      %s32 = ssub.s32 %s19, %s31
      %s33 = ssub.s32 %s20, %s27
      %s34 = sor.u32 %s32, %s33
      %p35 = scmp.eq.s32.totalorder %s34, 0
      %s37 = sadd.s32 %s36, 1
      %s38 = scalar_select %p35, %s36, %s37
      %p41 = pneg %p35
      %p42 = scmp.eq.s32.totalorder %s12, 1
      %p43 = por %p41, %p42
      %p44 = scmp.ne.s32.totalorder %s36, %s39
      %p45 = scmp.eq.s32.totalorder %s12, 0
      %p46 = por %p44, %p45
      %p47 = scmp.ne.s32.totalorder %s36, %s39
      %p48 = scmp.eq.s32.totalorder %s17, 1
      %p49 = por %p47, %p48
      %p50 = scmp.ne.s32.totalorder %s39, %s40
      %p51 = scmp.eq.s32.totalorder %s17, 0
      %p52 = por %p50, %p51
      %p53 = scmp.ne.s32.totalorder %s39, %s40
      %p54 = scmp.eq.s32.totalorder %s18, 1
      %p55 = por %p53, %p54
      %p57 = scmp.ne.s32.totalorder %s40, %s56
      %p58 = scmp.eq.s32.totalorder %s18, 0
      %p59 = por %p57, %p58
      %s60 = ssub.s32 %s20, %s27
      %p61 = scmp.eq.s32.totalorder %s60, 0
      %s63 = sadd.s32 %s62, 1
      %s64 = scalar_select %p61, %s62, %s63
      %p67 = pneg %p61
      %p68 = scmp.eq.s32.totalorder %s12, 1
      %p69 = por %p67, %p68
      %p70 = scmp.ne.s32.totalorder %s62, %s65
      %p71 = scmp.eq.s32.totalorder %s12, 0
      %p72 = por %p70, %p71
      %p73 = scmp.ne.s32.totalorder %s62, %s65
      %p74 = scmp.eq.s32.totalorder %s17, 1
      %p75 = por %p73, %p74
      %p76 = scmp.ne.s32.totalorder %s65, %s66
      %p77 = scmp.eq.s32.totalorder %s17, 0
      %p78 = por %p76, %p77
      %p79 = scmp.ne.s32.totalorder %s65, %s66
      %p80 = scmp.eq.s32.totalorder %s18, 1
      %p81 = por %p79, %p80
      %p83 = scmp.ne.s32.totalorder %s66, %s82
      %p84 = scmp.eq.s32.totalorder %s18, 0
      %p85 = por %p83, %p84
      %s87 = sadd.s32 %s86, 1
      %p90 = scmp.eq.s32.totalorder %s12, 1
      %p91 = scmp.ne.s32.totalorder %s86, %s88
      %p92 = scmp.eq.s32.totalorder %s12, 0
      %p93 = por %p91, %p92
      %p94 = scmp.ne.s32.totalorder %s86, %s88
      %p95 = scmp.eq.s32.totalorder %s17, 1
      %p96 = por %p94, %p95
      %p97 = scmp.ne.s32.totalorder %s88, %s89
      %p98 = scmp.eq.s32.totalorder %s17, 0
      %p99 = por %p97, %p98
      %p100 = scmp.ne.s32.totalorder %s88, %s89
      %p101 = scmp.eq.s32.totalorder %s18, 1
      %p102 = por %p100, %p101
      %p104 = scmp.ne.s32.totalorder %s89, %s103
      %p105 = scmp.eq.s32.totalorder %s18, 0
      %p106 = por %p104, %p105
      %s108 = sadd.s32 %s107, 1
      %p111 = scmp.eq.s32.totalorder %s12, 1
      %p112 = scmp.ne.s32.totalorder %s107, %s109
      %p113 = scmp.eq.s32.totalorder %s12, 0
      %p114 = por %p112, %p113
      %p115 = scmp.ne.s32.totalorder %s107, %s109
      %p116 = scmp.eq.s32.totalorder %s17, 1
      %p117 = por %p115, %p116
      %p118 = scmp.ne.s32.totalorder %s109, %s110
      %p119 = scmp.eq.s32.totalorder %s17, 0
      %p120 = por %p118, %p119
      %p121 = scmp.ne.s32.totalorder %s109, %s110
      %p122 = scmp.eq.s32.totalorder %s18, 1
      %p123 = por %p121, %p122
      %p125 = scmp.ne.s32.totalorder %s110, %s124
      %p126 = scmp.eq.s32.totalorder %s18, 0
      %p127 = por %p125, %p126
      %s129 = sadd.s32 %s128, 1
      %p132 = scmp.eq.s32.totalorder %s12, 1
      %p133 = scmp.ne.s32.totalorder %s128, %s130
      %p134 = scmp.eq.s32.totalorder %s12, 0
      %p135 = por %p133, %p134
      %p136 = scmp.ne.s32.totalorder %s128, %s130
      %p137 = scmp.eq.s32.totalorder %s17, 1
      %p138 = por %p136, %p137
      %p139 = scmp.ne.s32.totalorder %s130, %s131
      %p140 = scmp.eq.s32.totalorder %s17, 0
      %p141 = por %p139, %p140
      %p142 = scmp.ne.s32.totalorder %s130, %s131
      %p143 = scmp.eq.s32.totalorder %s18, 1
      %p144 = por %p142, %p143
      %p146 = scmp.ne.s32.totalorder %s131, %s145
      %p147 = scmp.eq.s32.totalorder %s18, 0
      %p148 = por %p146, %p147
      %s149 = ssub.s32 %s19, %s31
      %p150 = scmp.eq.s32.totalorder %s149, 0
      %s152 = sadd.s32 %s151, 1
      %s153 = scalar_select %p150, %s151, %s152
      %p156 = pneg %p150
      %p157 = scmp.eq.s32.totalorder %s12, 1
      %p158 = por %p156, %p157
      %p159 = scmp.ne.s32.totalorder %s151, %s154
      %p160 = scmp.eq.s32.totalorder %s12, 0
      %p161 = por %p159, %p160
      %p162 = scmp.ne.s32.totalorder %s151, %s154
      %p163 = scmp.eq.s32.totalorder %s17, 1
      %p164 = por %p162, %p163
      %p165 = scmp.ne.s32.totalorder %s154, %s155
      %p166 = scmp.eq.s32.totalorder %s17, 0
      %p167 = por %p165, %p166
      %p168 = scmp.ne.s32.totalorder %s154, %s155
      %p169 = scmp.eq.s32.totalorder %s18, 1
      %p170 = por %p168, %p169
      %p172 = scmp.ne.s32.totalorder %s155, %s171
      %p173 = scmp.eq.s32.totalorder %s18, 0
      %p174 = por %p172, %p173
      %p175 = scmp.le.s32.totalorder 1, %s12
      %p176 = scmp.lt.s32.totalorder %s12, 3
      %p177 = pnand %p175, %p176
      %p178 = pneg %p177
      // Predicated region
      $region9: #{tpu_custom_call.1} parent=5 // pred_check
        _
      $region10: #{tpu_custom_call.1} parent=5 // pred_check_branch
        %180 = sbr.rel (%p177) target = $region12
      $region11: #{tpu_custom_call.1} parent=5 // pred_region
        %s181 = ssub.s32 %s12, 1
        // Predicated region
        $region13: #{tpu_custom_call.1} parent=11 // pred_check
          %p182 = pneg %p99
        $region14: #{tpu_custom_call.1} parent=11 // pred_check_branch
          %184 = sbr.rel (%p182) target = $region16
        $region15: #{tpu_custom_call.1} parent=11 // pred_region
          _
        $region16: #{tpu_custom_call.1} parent=11 // pred_fallthru
          _
        // Predicated region
        $region17: #{tpu_custom_call.1} parent=11 // pred_check
          %p185 = pneg %p120
        $region18: #{tpu_custom_call.1} parent=11 // pred_check_branch
          %187 = sbr.rel (%p185) target = $region20
        $region19: #{tpu_custom_call.1} parent=11 // pred_region
          _
        $region20: #{tpu_custom_call.1} parent=11 // pred_fallthru
          _
        // Predicated region
        $region21: #{tpu_custom_call.1} parent=11 // pred_check
          %p188 = pneg %p141
        $region22: #{tpu_custom_call.1} parent=11 // pred_check_branch
          %190 = sbr.rel (%p188) target = $region24
        $region23: #{tpu_custom_call.1} parent=11 // pred_region
          _
        $region24: #{tpu_custom_call.1} parent=11 // pred_fallthru
          _
      $region12: #{tpu_custom_call.1} parent=5 // pred_fallthru
        _
      %p191 = scmp.lt.s32.totalorder %s12, 2
      // Predicated region
      $region25: #{tpu_custom_call.1} parent=5 // pred_check
        %p192 = pneg %p191
      $region26: #{tpu_custom_call.1} parent=5 // pred_check_branch
        %194 = sbr.rel (%p192) target = $region28
      $region27: #{tpu_custom_call.1} parent=5 // pred_region
        // Predicated region
        $region29: #{tpu_custom_call.1} parent=27 // pred_check
          %p195 = pneg %p46
        $region30: #{tpu_custom_call.1} parent=27 // pred_check_branch
          %197 = sbr.rel (%p195) target = $region32
        $region31: #{tpu_custom_call.1} parent=27 // pred_region
          %s198 = smul.u32 4, %s20
          %p199 = scmp.lt.s32.totalorder %s19, 0
          %s200 = scalar_select %p199, %s19, 0
          %p201 = scmp.lt.s32.totalorder %s198, 7
          %s202 = scalar_select %p201, %s198, 7
          %s203 = smul.addr %s200, 8
          %s204 = sadd.s32 %s202, %s203
          %s205 = smul.addr %s204, 4
          %s206 = scalar_lea.vmem %s0, %s205
          %s207 = smul.u32 4, %s20
        $region32: #{tpu_custom_call.1} parent=27 // pred_fallthru
          _
        // Predicated region
        $region33: #{tpu_custom_call.1} parent=27 // pred_check
          %p208 = pneg %p72
        $region34: #{tpu_custom_call.1} parent=27 // pred_check_branch
          %210 = sbr.rel (%p208) target = $region36
        $region35: #{tpu_custom_call.1} parent=27 // pred_region
          %s211 = smul.u32 64, %s20
          %p212 = scmp.lt.s32.totalorder %s211, 127
          %s213 = scalar_select %p212, %s211, 127
          %s214 = smul.addr %s213, 4
          %s215 = scalar_lea.vmem %s1, %s214
          %s216 = smul.u32 64, %s20
        $region36: #{tpu_custom_call.1} parent=27 // pred_fallthru
          _
      $region28: #{tpu_custom_call.1} parent=5 // pred_fallthru
        _
      %p217 = scmp.le.s32.totalorder 1, %s12
      %p218 = scmp.lt.s32.totalorder %s12, 3
      %p219 = pnand %p217, %p218
      %p220 = pneg %p219
      // Predicated region
      $region37: #{tpu_custom_call.1} parent=5 // pred_check
        _
      $region38: #{tpu_custom_call.1} parent=5 // pred_check_branch
        %222 = sbr.rel (%p219) target = $region40
      $region39: #{tpu_custom_call.1} parent=5 // pred_region
        %s223 = ssub.s32 %s12, 1
        %s224 = smul.u32 4, %s22
        %p225 = scmp.lt.s32.totalorder %s21, 0
        %s226 = scalar_select %p225, %s21, 0
        %p227 = scmp.lt.s32.totalorder %s224, 7
        %s228 = scalar_select %p227, %s224, 7
        %s229 = smul.addr %s226, 8
        %s230 = sadd.s32 %s228, %s229
        %s231 = smul.addr %s230, 4
        %s232 = scalar_lea.vmem %s0, %s231
        %p233 = pneg %p52
        %p234 = pneg %p49
        %s235 = smul.u32 64, %s22
        %p236 = scmp.lt.s32.totalorder %s235, 127
        %s237 = scalar_select %p236, %s235, 127
        %s238 = smul.addr %s237, 4
        %s239 = scalar_lea.vmem %s1, %s238
        %p240 = pneg %p78
        %p241 = pneg %p75
        %p242 = pneg %p99
        %p243 = pneg %p96
        %p244 = pneg %p120
        %p245 = pneg %p117
        %p246 = pneg %p141
        %p247 = pneg %p138
        %p248 = pneg %p167
        %p249 = pneg %p164
        %s250 = smul.u32 4, %s22
        %p251 = scmp.lt.s32.totalorder %s21, 0
        %s252 = scalar_select %p251, %s21, 0
        %p253 = scmp.lt.s32.totalorder %s250, 7
        %s254 = scalar_select %p253, %s250, 7
        %s255 = smul.addr %s252, 8
        %s256 = sadd.s32 %s254, %s255
        %s257 = smul.addr %s256, 4
        %s258 = scalar_lea.vmem %s0, %s257
        %s259 = smul.u32 4, %s22
        %s260 = smul.u32 64, %s22
        %p261 = scmp.lt.s32.totalorder %s260, 127
        %s262 = scalar_select %p261, %s260, 127
        %s263 = smul.addr %s262, 4
        %s264 = scalar_lea.vmem %s1, %s263
        %s265 = smul.u32 64, %s22
        %p267 = scmp.eq.s32.totalorder %s22, 0
        // Predicated region
        $region41: #{tpu_custom_call.1} parent=39 // pred_check
          %p268 = pneg %p267
        $region42: #{tpu_custom_call.1} parent=39 // pred_check_branch
          %270 = sbr.rel (%p268) target = $region44
        $region43: #{tpu_custom_call.1} parent=39 // pred_region
          %vm271 = vcmask 261120
          %272 = vst.msk [vmem:[#allocation2] sm:$0xff] %vm271, 0.0
        $region44: #{tpu_custom_call.1} parent=39 // pred_fallthru
          _
        %v273 = vld [vmem:[#allocation2] sm:$0xff]
        %v274 = vld [vmem:[%s258] sm:$0xff]
        %v275 = vld [vmem:[%s258 + $0x8] sm:$0xff]
        %v276 = vld [vmem:[%s264] sm:$0xf]
        %v277 = vld [vmem:[%s264 + $0x4] sm:$0xf]
        %v278 = vld [vmem:[%s264 + $0x8] sm:$0xf]
        %v279 = vld [vmem:[%s264 + $0xc] sm:$0xf]
        %v280 = vld [vmem:[%s264 + $0x10] sm:$0xf]
        %v281 = vld [vmem:[%s264 + $0x14] sm:$0xf]
        %v282 = vld [vmem:[%s264 + $0x18] sm:$0xf]
        %v283 = vld [vmem:[%s264 + $0x1c] sm:$0xf]
        %v284 = vld [vmem:[%s264 + $0x20] sm:$0xf]
        %v285 = vld [vmem:[%s264 + $0x24] sm:$0xf]
        %v286 = vld [vmem:[%s264 + $0x28] sm:$0xf]
        %v287 = vld [vmem:[%s264 + $0x2c] sm:$0xf]
        %v288 = vld [vmem:[%s264 + $0x30] sm:$0xf]
        %v289 = vld [vmem:[%s264 + $0x34] sm:$0xf]
        %v290 = vld [vmem:[%s264 + $0x38] sm:$0xf]
        %v291 = vld [vmem:[%s264 + $0x3c] sm:$0xf]
        %v292 = vld [vmem:[%s264 + $0x40] sm:$0xf]
        %v293 = vld [vmem:[%s264 + $0x44] sm:$0xf]
        %v294 = vld [vmem:[%s264 + $0x48] sm:$0xf]
        %v295 = vld [vmem:[%s264 + $0x4c] sm:$0xf]
        %v296 = vld [vmem:[%s264 + $0x50] sm:$0xf]
        %v297 = vld [vmem:[%s264 + $0x54] sm:$0xf]
        %v298 = vld [vmem:[%s264 + $0x58] sm:$0xf]
        %v299 = vld [vmem:[%s264 + $0x5c] sm:$0xf]
        %v300 = vld [vmem:[%s264 + $0x60] sm:$0xf]
        %v301 = vld [vmem:[%s264 + $0x64] sm:$0xf]
        %v302 = vld [vmem:[%s264 + $0x68] sm:$0xf]
        %v303 = vld [vmem:[%s264 + $0x6c] sm:$0xf]
        %v304 = vld [vmem:[%s264 + $0x70] sm:$0xf]
        %v305 = vld [vmem:[%s264 + $0x74] sm:$0xf]
        %v306 = vld [vmem:[%s264 + $0x78] sm:$0xf]
        %v307 = vld [vmem:[%s264 + $0x7c] sm:$0xf]
        %v308 = vld [vmem:[%s264 + $0x80] sm:$0xf]
        %v309 = vld [vmem:[%s264 + $0x84] sm:$0xf]
        %v310 = vld [vmem:[%s264 + $0x88] sm:$0xf]
        %v311 = vld [vmem:[%s264 + $0x8c] sm:$0xf]
        %v312 = vld [vmem:[%s264 + $0x90] sm:$0xf]
        %v313 = vld [vmem:[%s264 + $0x94] sm:$0xf]
        %v314 = vld [vmem:[%s264 + $0x98] sm:$0xf]
        %v315 = vld [vmem:[%s264 + $0x9c] sm:$0xf]
        %v316 = vld [vmem:[%s264 + $0xa0] sm:$0xf]
        %v317 = vld [vmem:[%s264 + $0xa4] sm:$0xf]
        %v318 = vld [vmem:[%s264 + $0xa8] sm:$0xf]
        %v319 = vld [vmem:[%s264 + $0xac] sm:$0xf]
        %v320 = vld [vmem:[%s264 + $0xb0] sm:$0xf]
        %v321 = vld [vmem:[%s264 + $0xb4] sm:$0xf]
        %v322 = vld [vmem:[%s264 + $0xb8] sm:$0xf]
        %v323 = vld [vmem:[%s264 + $0xbc] sm:$0xf]
        %v324 = vld [vmem:[%s264 + $0xc0] sm:$0xf]
        %v325 = vld [vmem:[%s264 + $0xc4] sm:$0xf]
        %v326 = vld [vmem:[%s264 + $0xc8] sm:$0xf]
        %v327 = vld [vmem:[%s264 + $0xcc] sm:$0xf]
        %v328 = vld [vmem:[%s264 + $0xd0] sm:$0xf]
        %v329 = vld [vmem:[%s264 + $0xd4] sm:$0xf]
        %v330 = vld [vmem:[%s264 + $0xd8] sm:$0xf]
        %v331 = vld [vmem:[%s264 + $0xdc] sm:$0xf]
        %v332 = vld [vmem:[%s264 + $0xe0] sm:$0xf]
        %v333 = vld [vmem:[%s264 + $0xe4] sm:$0xf]
        %v334 = vld [vmem:[%s264 + $0xe8] sm:$0xf]
        %v335 = vld [vmem:[%s264 + $0xec] sm:$0xf]
        %v336 = vld [vmem:[%s264 + $0xf0] sm:$0xf]
        %v337 = vld [vmem:[%s264 + $0xf4] sm:$0xf]
        %v338 = vld [vmem:[%s264 + $0xf8] sm:$0xf]
        %v339 = vld [vmem:[%s264 + $0xfc] sm:$0xf]
        %v342 = vunpack.c.l.b16 %v274
        %v343 = vunpack.c.h.b16 %v274
        %v344 = vunpack.c.l.b16 %v275
        %v345 = vunpack.c.h.b16 %v275
        %v346 = vpack.c.b16 %v342, %v342
        %v347 = vpack.c.b16 %v343, %v343
        %v348 = vpack.c.b16 %v344, %v344
        %v349 = vpack.c.b16 %v345, %v345
        %v418 = vunpack.c.l.b16 %v276
        %v419 = vunpack.c.l.b16 %v277
        %v420 = vunpack.c.l.b16 %v278
        %v421 = vunpack.c.l.b16 %v279
        %v422 = vunpack.c.l.b16 %v280
        %v423 = vunpack.c.l.b16 %v281
        %v424 = vunpack.c.l.b16 %v282
        %v425 = vunpack.c.l.b16 %v283
        %v426 = vunpack.c.l.b16 %v284
        %v427 = vunpack.c.l.b16 %v285
        %v428 = vunpack.c.l.b16 %v286
        %v429 = vunpack.c.l.b16 %v287
        %v430 = vunpack.c.l.b16 %v288
        %v431 = vunpack.c.l.b16 %v289
        %v432 = vunpack.c.l.b16 %v290
        %v433 = vunpack.c.l.b16 %v291
        %v434 = vunpack.c.l.b16 %v292
        %v435 = vunpack.c.l.b16 %v293
        %v436 = vunpack.c.l.b16 %v294
        %v437 = vunpack.c.l.b16 %v295
        %v438 = vunpack.c.l.b16 %v296
        %v439 = vunpack.c.l.b16 %v297
        %v440 = vunpack.c.l.b16 %v298
        %v441 = vunpack.c.l.b16 %v299
        %v442 = vunpack.c.l.b16 %v300
        %v443 = vunpack.c.l.b16 %v301
        %v444 = vunpack.c.l.b16 %v302
        %v445 = vunpack.c.l.b16 %v303
        %v446 = vunpack.c.l.b16 %v304
        %v447 = vunpack.c.l.b16 %v305
        %v448 = vunpack.c.l.b16 %v306
        %v449 = vunpack.c.l.b16 %v307
        %v450 = vunpack.c.l.b16 %v308
        %v451 = vunpack.c.l.b16 %v309
        %v452 = vunpack.c.l.b16 %v310
        %v453 = vunpack.c.l.b16 %v311
        %v454 = vunpack.c.l.b16 %v312
        %v455 = vunpack.c.l.b16 %v313
        %v456 = vunpack.c.l.b16 %v314
        %v457 = vunpack.c.l.b16 %v315
        %v458 = vunpack.c.l.b16 %v316
        %v459 = vunpack.c.l.b16 %v317
        %v460 = vunpack.c.l.b16 %v318
        %v461 = vunpack.c.l.b16 %v319
        %v462 = vunpack.c.l.b16 %v320
        %v463 = vunpack.c.l.b16 %v321
        %v464 = vunpack.c.l.b16 %v322
        %v465 = vunpack.c.l.b16 %v323
        %v466 = vunpack.c.l.b16 %v324
        %v467 = vunpack.c.l.b16 %v325
        %v468 = vunpack.c.l.b16 %v326
        %v469 = vunpack.c.l.b16 %v327
        %v470 = vunpack.c.l.b16 %v328
        %v471 = vunpack.c.l.b16 %v329
        %v472 = vunpack.c.l.b16 %v330
        %v473 = vunpack.c.l.b16 %v331
        %v474 = vunpack.c.l.b16 %v332
        %v475 = vunpack.c.l.b16 %v333
        %v476 = vunpack.c.l.b16 %v334
        %v477 = vunpack.c.l.b16 %v335
        %v478 = vunpack.c.l.b16 %v336
        %v479 = vunpack.c.l.b16 %v337
        %v480 = vunpack.c.l.b16 %v338
        %v481 = vunpack.c.l.b16 %v339
        %v482 = vpack.c.b16 %v419, %v418
        %v483 = vpack.c.b16 %v421, %v420
        %v484 = vpack.c.b16 %v423, %v422
        %v485 = vpack.c.b16 %v425, %v424
        %v486 = vpack.c.b16 %v427, %v426
        %v487 = vpack.c.b16 %v429, %v428
        %v488 = vpack.c.b16 %v431, %v430
        %v489 = vpack.c.b16 %v433, %v432
        %v490 = vpack.c.b16 %v435, %v434
        %v491 = vpack.c.b16 %v437, %v436
        %v492 = vpack.c.b16 %v439, %v438
        %v493 = vpack.c.b16 %v441, %v440
        %v494 = vpack.c.b16 %v443, %v442
        %v495 = vpack.c.b16 %v445, %v444
        %v496 = vpack.c.b16 %v447, %v446
        %v497 = vpack.c.b16 %v449, %v448
        %v498 = vpack.c.b16 %v451, %v450
        %v499 = vpack.c.b16 %v453, %v452
        %v500 = vpack.c.b16 %v455, %v454
        %v501 = vpack.c.b16 %v457, %v456
        %v502 = vpack.c.b16 %v459, %v458
        %v503 = vpack.c.b16 %v461, %v460
        %v504 = vpack.c.b16 %v463, %v462
        %v505 = vpack.c.b16 %v465, %v464
        %v506 = vpack.c.b16 %v467, %v466
        %v507 = vpack.c.b16 %v469, %v468
        %v508 = vpack.c.b16 %v471, %v470
        %v509 = vpack.c.b16 %v473, %v472
        %v510 = vpack.c.b16 %v475, %v474
        %v511 = vpack.c.b16 %v477, %v476
        %v512 = vpack.c.b16 %v479, %v478
        %v513 = vpack.c.b16 %v481, %v480
        %546 = vmatprep.subr.bf16.mxu0 0
        %547 = vmatpush1.bf16.msra.mxu0 %v482
        %548 = vmatprep.subr.bf16.mxu0 0
        %549 = vmatpush1.bf16.msra.mxu0 %v483
        %550 = vmatprep.subr.bf16.mxu0 0
        %551 = vmatpush1.bf16.msra.mxu0 %v484
        %552 = vmatprep.subr.bf16.mxu0 0
        %553 = vmatpush1.bf16.msra.mxu0 %v485
        %554 = vmatprep.subr.bf16.mxu0 0
        %555 = vmatpush1.bf16.msra.mxu0 %v486
        %556 = vmatprep.subr.bf16.mxu0 0
        %557 = vmatpush1.bf16.msra.mxu0 %v487
        %558 = vmatprep.subr.bf16.mxu0 0
        %559 = vmatpush1.bf16.msra.mxu0 %v488
        %560 = vmatprep.subr.bf16.mxu0 0
        %561 = vmatpush1.bf16.msra.mxu0 %v489
        %562 = vmatprep.subr.bf16.mxu0 0
        %563 = vmatpush1.bf16.msra.mxu0 %v490
        %564 = vmatprep.subr.bf16.mxu0 0
        %565 = vmatpush1.bf16.msra.mxu0 %v491
        %566 = vmatprep.subr.bf16.mxu0 0
        %567 = vmatpush1.bf16.msra.mxu0 %v492
        %568 = vmatprep.subr.bf16.mxu0 0
        %569 = vmatpush1.bf16.msra.mxu0 %v493
        %570 = vmatprep.subr.bf16.mxu0 0
        %571 = vmatpush1.bf16.msra.mxu0 %v494
        %572 = vmatprep.subr.bf16.mxu0 0
        %573 = vmatpush1.bf16.msra.mxu0 %v495
        %574 = vmatprep.subr.bf16.mxu0 0
        %575 = vmatpush1.bf16.msra.mxu0 %v496
        %576 = vmatprep.subr.bf16.mxu0 0
        %577 = vmatpush1.bf16.msra.mxu0 %v497
        %578 = vmatprep.mubr.bf16.mxu0 %v347
        %579 = vmatmul.mubr.bf16.gmra.mrb[0].mxu0 %v346
        %v580 = vpop.f32.mrb[0].mxu0
        %v581 = vadd.f32 0.0, %v580
        %v582 = vpop.f32.mrb[0].mxu0
        %v583 = vpop.f32.mrb[0].mxu0
        %v584 = vpop.f32.mrb[0].mxu0
        %585 = vdwg.mxu0
        %586 = vmatprep.subr.bf16.mxu0 0
        %587 = vmatpush1.bf16.msra.mxu0 %v498
        %588 = vmatprep.subr.bf16.mxu0 0
        %589 = vmatpush1.bf16.msra.mxu0 %v499
        %590 = vmatprep.subr.bf16.mxu0 0
        %591 = vmatpush1.bf16.msra.mxu0 %v500
        %592 = vmatprep.subr.bf16.mxu0 0
        %593 = vmatpush1.bf16.msra.mxu0 %v501
        %594 = vmatprep.subr.bf16.mxu0 0
        %595 = vmatpush1.bf16.msra.mxu0 %v502
        %596 = vmatprep.subr.bf16.mxu0 0
        %597 = vmatpush1.bf16.msra.mxu0 %v503
        %598 = vmatprep.subr.bf16.mxu0 0
        %599 = vmatpush1.bf16.msra.mxu0 %v504
        %600 = vmatprep.subr.bf16.mxu0 0
        %601 = vmatpush1.bf16.msra.mxu0 %v505
        %602 = vmatprep.subr.bf16.mxu0 0
        %603 = vmatpush1.bf16.msra.mxu0 %v506
        %604 = vmatprep.subr.bf16.mxu0 0
        %605 = vmatpush1.bf16.msra.mxu0 %v507
        %606 = vmatprep.subr.bf16.mxu0 0
        %607 = vmatpush1.bf16.msra.mxu0 %v508
        %608 = vmatprep.subr.bf16.mxu0 0
        %609 = vmatpush1.bf16.msra.mxu0 %v509
        %610 = vmatprep.subr.bf16.mxu0 0
        %611 = vmatpush1.bf16.msra.mxu0 %v510
        %612 = vmatprep.subr.bf16.mxu0 0
        %613 = vmatpush1.bf16.msra.mxu0 %v511
        %614 = vmatprep.subr.bf16.mxu0 0
        %615 = vmatpush1.bf16.msra.mxu0 %v512
        %616 = vmatprep.subr.bf16.mxu0 0
        %617 = vmatpush1.bf16.msra.mxu0 %v513
        %618 = vmatprep.mubr.bf16.mxu0 %v349
        %619 = vmatmul.mubr.bf16.gmra.mrb[0].mxu0 %v348
        %v620 = vpop.f32.mrb[0].mxu0
        %v621 = vadd.f32 %v581, %v620
        %v622 = vpop.f32.mrb[0].mxu0
        %v623 = vpop.f32.mrb[0].mxu0
        %v624 = vpop.f32.mrb[0].mxu0
        %625 = vdwg.mxu0
        %v626 = vadd.f32 %v273, %v621
        %vm627 = vcmask 261120
        %628 = vst.msk [vmem:[#allocation2] sm:$0xff] %vm627, %v626
        %p629 = scmp.eq.s32.totalorder %s22, 1
        // Predicated region
        $region45: #{tpu_custom_call.1} parent=39 // pred_check
          %p630 = pneg %p629
        $region46: #{tpu_custom_call.1} parent=39 // pred_check_branch
          %632 = sbr.rel (%p630) target = $region48
        $region47: #{tpu_custom_call.1} parent=39 // pred_region
          %v633 = vld [vmem:[#allocation2] sm:$0xff]
          %v634 = vld [vmem:[%s2] sm:$0x1]
          %v636 = vlaneseq
          %v637 = vshrl.u32 %v636, 7
          %v638 = vsub.s32 0, %v637
          %v639 = vrot.slane %v634, %v638
          %v641 = vadd.f32 %v633, %v639
          %v642 = vmax.f32 %v641, 0.0
          %v643 = vld [vmem:[%s3] sm:$0xff]
          %v644 = vld [vmem:[%s3 + $0x8] sm:$0xff]
          %v645 = vld [vmem:[%s3 + $0x10] sm:$0xff]
          %v646 = vld [vmem:[%s3 + $0x18] sm:$0xff]
          %v647 = vld [vmem:[%s4] sm:$0x1]
          %v649 = vlaneseq
          %v650 = vshrl.u32 %v649, 7
          %v651 = vsub.s32 0, %v650
          %v652 = vrot.slane %v647, %v651
          %v655 = vsel %vm627, %v642, 0
          %657 = vmatprep.subr.mxu0 0.0
          %658 = vmatpush1.msra.mxu0 %v643
          %659 = vmatprep.subr.mxu0 0.0
          %660 = vmatpush1.msra.mxu0 %v644
          %661 = vmatprep.subr.mxu0 0.0
          %662 = vmatpush1.msra.mxu0 %v645
          %663 = vmatprep.subr.mxu0 0.0
          %664 = vmatpush1.msra.mxu0 %v646
          %665 = vmatprep.subr.mxu0 0.0
          %666 = vmatpush1.msra.mxu0 0.0
          %667 = vmatprep.subr.mxu0 0.0
          %668 = vmatpush1.msra.mxu0 0.0
          %669 = vmatprep.subr.mxu0 0.0
          %670 = vmatpush1.msra.mxu0 0.0
          %671 = vmatprep.subr.mxu0 0.0
          %672 = vmatpush1.msra.mxu0 0.0
          %673 = vmatprep.subr.mxu0 0.0
          %674 = vmatpush1.msra.mxu0 0.0
          %675 = vmatprep.subr.mxu0 0.0
          %676 = vmatpush1.msra.mxu0 0.0
          %677 = vmatprep.subr.mxu0 0.0
          %678 = vmatpush1.msra.mxu0 0.0
          %679 = vmatprep.subr.mxu0 0.0
          %680 = vmatpush1.msra.mxu0 0.0
          %681 = vmatprep.subr.mxu0 0.0
          %682 = vmatpush1.msra.mxu0 0.0
          %683 = vmatprep.subr.mxu0 0.0
          %684 = vmatpush1.msra.mxu0 0.0
          %685 = vmatprep.subr.mxu0 0.0
          %686 = vmatpush1.msra.mxu0 0.0
          %687 = vmatprep.subr.mxu0 0.0
          %688 = vmatpush1.msra.mxu0 0.0
          %689 = vmatprep.subr.mxu0 0.0
          %690 = vmatpush1.msra.mxu0 0.0
          %691 = vmatprep.subr.mxu0 0.0
          %692 = vmatpush1.msra.mxu0 0.0
          %693 = vmatprep.subr.mxu0 0.0
          %694 = vmatpush1.msra.mxu0 0.0
          %695 = vmatprep.subr.mxu0 0.0
          %696 = vmatpush1.msra.mxu0 0.0
          %697 = vmatprep.subr.mxu0 0.0
          %698 = vmatpush1.msra.mxu0 0.0
          %699 = vmatprep.subr.mxu0 0.0
          %700 = vmatpush1.msra.mxu0 0.0
          %701 = vmatprep.subr.mxu0 0.0
          %702 = vmatpush1.msra.mxu0 0.0
          %703 = vmatprep.subr.mxu0 0.0
          %704 = vmatpush1.msra.mxu0 0.0
          %705 = vmatprep.subr.mxu0 0.0
          %706 = vmatpush1.msra.mxu0 0.0
          %707 = vmatprep.subr.mxu0 0.0
          %708 = vmatpush1.msra.mxu0 0.0
          %709 = vmatprep.subr.mxu0 0.0
          %710 = vmatpush1.msra.mxu0 0.0
          %711 = vmatprep.subr.mxu0 0.0
          %712 = vmatpush1.msra.mxu0 0.0
          %713 = vmatprep.subr.mxu0 0.0
          %714 = vmatpush1.msra.mxu0 0.0
          %715 = vmatprep.subr.mxu0 0.0
          %716 = vmatpush1.msra.mxu0 0.0
          %717 = vmatprep.subr.mxu0 0.0
          %718 = vmatpush1.msra.mxu0 0.0
          %719 = vmatprep.subr.mxu0 0.0
          %720 = vmatpush1.msra.mxu0 0.0
          %721 = vmatprep.mubr.f32.mxu0 0.0
          %722 = vmatmul.mubr.f32.gmra.mrb[0].mxu0 %v655
          %v723 = vpop.f32.mrb[0].mxu0
          %v724 = vadd.f32 %v652, %v723
          %v725 = vpop.f32.mrb[0].mxu0
          %726 = vdwg.mxu0
          %727 = vst [vmem:[#allocation3] sm:$0xff] %v724
        $region48: #{tpu_custom_call.1} parent=39 // pred_fallthru
          _
        // Predicated region
        $region49: #{tpu_custom_call.1} parent=39 // pred_check
          %p728 = pneg %p164
        $region50: #{tpu_custom_call.1} parent=39 // pred_check_branch
          %730 = sbr.rel (%p728) target = $region52
        $region51: #{tpu_custom_call.1} parent=39 // pred_region
          %s732 = ssub.s32 128, 128
          %733 = vsyncadd [#allocation4], %s732
          %s734 = smul.addr %s21, 128
          %s735 = scalar_lea.hbm %s5, %s734
          %s737 = sshll.u32 [#allocation3], 4
          %s738 = int_to_ptr.vmem [resolvable:$true] %s737
          %740 = dma.vmem_to_hbm [thread:$0]  %s738, 128, %s735, [#allocation4]
        $region52: #{tpu_custom_call.1} parent=39 // pred_fallthru
          _
        // Predicated region
        $region53: #{tpu_custom_call.1} parent=39 // pred_check
          %p741 = pneg %p164
        $region54: #{tpu_custom_call.1} parent=39 // pred_check_branch
          %743 = sbr.rel (%p741) target = $region56
        $region55: #{tpu_custom_call.1} parent=39 // pred_region
          %744 = dma.done [#allocation4], 128
        $region56: #{tpu_custom_call.1} parent=39 // pred_fallthru
          _
      $region40: #{tpu_custom_call.1} parent=5 // pred_fallthru
        _
      %p745 = scmp.le.s32.totalorder 2, %s12
      // Predicated region
      $region57: #{tpu_custom_call.1} parent=5 // pred_check
        %p746 = pneg %p745
      $region58: #{tpu_custom_call.1} parent=5 // pred_check_branch
        %748 = sbr.rel (%p746) target = $region60
      $region59: #{tpu_custom_call.1} parent=5 // pred_region
        %s749 = ssub.s32 %s12, 2
      $region60: #{tpu_custom_call.1} parent=5 // pred_fallthru
        _
    $region6: #{tpu_custom_call.1} parent=1 // loop_footer
      %s16 = sadd.s32 1, %s12
    $region7: #{tpu_custom_call.1} parent=1 // loop_footer_branch
      %11 = sbr.rel target = $region3
    $region8: #{tpu_custom_call.1} parent=1 // loop_exit
      _
    %750 = vsyncpa [#allocation4], 1
    %s751 = scalar_lea.sflag [#allocation4], 1
    %752 = vsyncpa %s751, 1

</llo_original>
